<compile_context>
chip_gen: v7x
topology: tpu7x:2x2x1
jax: 0.10.0
libtpu: 0.0.40
codegen_flags: <defaults>
</compile_context>

<pallas_src>
import functools

import jax
import jax.numpy as jnp
from jax import lax
from jax.experimental import pallas as pl
from jax.experimental.pallas import tpu as pltpu

_LANE = 128        # vreg lane width
_SUB = 8           # vreg sublane count (f32)
_N_MOMENTS = 5     # sum p, sum t, sum p*p, sum t*t, sum p*t
_CHUNK_ROWS = 128  # rows per in-kernel strip (16 f32 vregs per operand)


def _cdiv(a, b):
    return -(-a // b)


def _round_up(a, b):
    return _cdiv(a, b) * b


def _sublane_packing(dtype):
    """Second-to-last-dim packing for the dtype: 8 f32, 16 bf16/f16, 32 int8."""
    return _SUB * max(1, 4 // jnp.dtype(dtype).itemsize)


@functools.lru_cache(maxsize=None)
def _num_tensorcores():
    """1 on single-TC chips (v5e/v6e), 2 on megacore parts (v4/v5p/v7x)."""
    try:
        kind = jax.devices()[0].device_kind.lower().replace(" ", "")
    except Exception:
        return 1
    return 2 if any(tag in kind for tag in ("v4", "v5p", "v7", "7x")) else 1


@functools.lru_cache(maxsize=None)
def _select_tiling():
    """(max block rows, scoped VMEM limit) chosen per chip generation."""
    vmem = None
    try:
        info_fn = getattr(pltpu, "get_tpu_info", None)
        if info_fn is not None:
            vmem = getattr(info_fn(), "vmem_capacity_bytes", None)
    except Exception:
        vmem = None
    if not vmem:
        vmem = 64 * 1024 * 1024              # conservative (v7x-sized) default
    if vmem >= 96 * 1024 * 1024:             # v4 / v5e / v5p / v6e: 128 MiB VMEM
        return 8192, 64 * 1024 * 1024        # 4 MiB f32 per input block
    return 4096, 32 * 1024 * 1024            # v7x: 64 MiB VMEM


def _make_moment_kernel(rows_total, blk_rows, blocks_per_core, chunk, n_chunks):
    """Kernel accumulating the 5 raw moments for one (core, block) grid step."""

    def kernel(p_ref, t_ref, out_ref):
        c = pl.program_id(0)
        i = pl.program_id(1)

        # Output accumulator is resident across the inner ("arbitrary") axis.
        @pl.when(i == 0)
        def _():
            out_ref[...] = jnp.zeros_like(out_ref)

        # Logical row range owned by this grid step (the DMA'd block may be
        # clamped / partially out of bounds; the mask below fixes that).
        start_row = (c * blocks_per_core + i) * blk_rows
        valid = jnp.clip(rows_total - start_row, 0, blk_rows)

        # Hoisted, loop-invariant row iota (anti-pattern: don't rebuild in loop).
        row_iota = lax.broadcasted_iota(jnp.int32, (chunk, _LANE), 0)

        def body(j, carry):
            sp, st, spp, stt, spt = carry
            row0 = j * chunk
            if isinstance(row0, int):
                start = row0
            else:
                start = pl.multiple_of(row0, chunk)
            p = p_ref[pl.ds(start, chunk), :].astype(jnp.float32)
            t = t_ref[pl.ds(start, chunk), :].astype(jnp.float32)
            # Mask rows past the logical end (ragged tail / fully OOB blocks)
            # BEFORE any product, so unspecified OOB data never contributes.
            m = (row0 + row_iota) < valid
            p = jnp.where(m, p, 0.0)
            t = jnp.where(m, t, 0.0)
            p3 = p.reshape(chunk // _SUB, _SUB, _LANE)
            t3 = t.reshape(chunk // _SUB, _SUB, _LANE)
            sp = sp + jnp.sum(p3, axis=0)
            st = st + jnp.sum(t3, axis=0)
            spp = spp + jnp.sum(p3 * p3, axis=0)
            stt = stt + jnp.sum(t3 * t3, axis=0)
            spt = spt + jnp.sum(p3 * t3, axis=0)
            return sp, st, spp, stt, spt

        zero = jnp.zeros((_SUB, _LANE), jnp.float32)
        init = (zero, zero, zero, zero, zero)
        if n_chunks <= 8:
            acc = init
            for j in range(n_chunks):      # short fixed trip count: full unroll
                acc = body(j, acc)
        else:
            acc = lax.fori_loop(0, n_chunks, body, init)
        sp, st, spp, stt, spt = acc

        # Only 5 VMEM accumulator updates per block step.
        out_ref[0, 0, :, :] += sp
        out_ref[0, 1, :, :] += st
        out_ref[0, 2, :, :] += spp
        out_ref[0, 3, :, :] += stt
        out_ref[0, 4, :, :] += spt

    return kernel


def cost_volunm_loss(pred, target):
    """Pearson correlation matrix of stacked flattened (pred, target).

    pred, target: arrays of identical shape (e.g. NCHW).
    Returns a (2, 2) float32 matrix [[1, r], [r, 1]].
    """
    assert pred.shape == target.shape, "pred/target must have identical shapes"
    n_elems = int(pred.size)
    dtype = pred.dtype

    flat_p = pred.reshape(-1)     # free reshape (contiguous)
    flat_t = target.reshape(-1)

    rem = n_elems % _LANE
    if rem:
        # Only path with a wrapper-side copy: pad <128 zeros so the flat array
        # forms a lane-dense (rows, 128) view.  128-divisible sizes (the
        # common case) are reshaped for free with zero extra HBM traffic.
        pad = _LANE - rem
        flat_p = jnp.concatenate([flat_p, jnp.zeros((pad,), dtype=flat_p.dtype)])
        flat_t = jnp.concatenate([flat_t, jnp.zeros((pad,), dtype=flat_t.dtype)])

    rows = flat_p.size // _LANE
    p2 = flat_p.reshape(rows, _LANE)   # free reshape
    t2 = flat_t.reshape(rows, _LANE)

    n_cores = _num_tensorcores()
    max_blk_rows, vmem_limit = _select_tiling()
    packing = _sublane_packing(dtype)

    rows_per_core = _cdiv(rows, n_cores)
    if rows_per_core <= _CHUNK_ROWS:
        blk_rows = _round_up(rows_per_core, packing)
        chunk = blk_rows
    else:
        blk_rows = min(max_blk_rows, _round_up(rows_per_core, _CHUNK_ROWS))
        chunk = _CHUNK_ROWS
    n_chunks = blk_rows // chunk

    total_blocks = _cdiv(rows, blk_rows)
    blocks_per_core = _cdiv(total_blocks, n_cores)
    last_block = total_blocks - 1

    def in_index_map(c, i):
        # Clamp so the DMA'd block always starts inside the array; blocks that
        # are logically past the end are fully masked in the kernel.
        return (jnp.minimum(c * blocks_per_core + i, last_block), 0)

    kernel = _make_moment_kernel(rows, blk_rows, blocks_per_core, chunk, n_chunks)

    cost = pl.CostEstimate(
        flops=8 * n_elems,
        transcendentals=0,
        bytes_accessed=2 * n_elems * jnp.dtype(dtype).itemsize,
    )

    moments = pl.pallas_call(
        kernel,
        out_shape=jax.ShapeDtypeStruct(
            (n_cores, _N_MOMENTS, _SUB, _LANE), jnp.float32),
        grid_spec=pltpu.PrefetchScalarGridSpec(
            num_scalar_prefetch=0,
            grid=(n_cores, blocks_per_core),
            in_specs=[
                pl.BlockSpec((blk_rows, _LANE), in_index_map),
                pl.BlockSpec((blk_rows, _LANE), in_index_map),
            ],
            out_specs=pl.BlockSpec(
                (1, _N_MOMENTS, _SUB, _LANE), lambda c, i: (c, 0, 0, 0)),
        ),
        compiler_params=pltpu.CompilerParams(
            dimension_semantics=("parallel", "arbitrary"),
            vmem_limit_bytes=vmem_limit,
        ),
        cost_estimate=cost,
    )(p2, t2)

    # Tiny finalize in plain JAX: combine per-core / per-lane partial moments.
    # (Single-pass raw-moment formulas; see numerics note in the header.)
    m = jnp.sum(moments, axis=(0, 2, 3))  # (5,)
    sp, st, spp, stt, spt = m[0], m[1], m[2], m[3], m[4]
    n = jnp.float32(n_elems)
    cov_pt = spt - sp * st / n
    var_p = spp - sp * sp / n
    var_t = stt - st * st / n
    r = cov_pt * lax.rsqrt(var_p * var_t)
    r = jnp.clip(r, -1.0, 1.0)   # NaN (constant input) passes through, as in torch

    one = jnp.float32(1.0)
    return jnp.stack([jnp.stack([one, r]), jnp.stack([r, one])])


def _reference(pred, target):
    return jnp.corrcoef(jnp.stack([pred.ravel(), target.ravel()]))


if __name__ == "__main__":
    key = jax.random.PRNGKey(0)

    # 1) Small shape consistent with the module (NCHW = 2, 4, 16, 16);
    #    size is 128-divisible -> zero-copy lane-dense path.
    kp, kt, key = jax.random.split(key, 3)
    pred = jax.random.normal(kp, (2, 4, 16, 16), dtype=jnp.float32)
    target = 0.7 * pred + 0.3 * jax.random.normal(
        kt, (2, 4, 16, 16), dtype=jnp.float32)
    result = jax.block_until_ready(cost_volunm_loss(pred, target))
    ref = _reference(pred, target)
    assert jnp.allclose(result, ref, atol=1e-4, rtol=1e-4), (result, ref)

    # 2) Small ragged shape (size not a multiple of 8*128): exercises the
    #    in-kernel iota masking of the partial trailing block.
    kp, kt, key = jax.random.split(key, 3)
    pred_r = jax.random.normal(kp, (2, 3, 20, 20), dtype=jnp.float32)
    target_r = 0.9 * pred_r + 0.1 * jax.random.normal(
        kt, (2, 3, 20, 20), dtype=jnp.float32)
    result_r = jax.block_until_ready(cost_volunm_loss(pred_r, target_r))
    ref_r = _reference(pred_r, target_r)
    assert jnp.allclose(result_r, ref_r, atol=1e-4, rtol=1e-4), (result_r, ref_r)

    print("KERNEL_OK")
</pallas_src>

<mosaic_0001>
module attributes {stable_mosaic.version = 11 : i64} {
  func.func @kernel(%arg0: i32, %arg1: i32, %arg2: memref<16x128xf32, #tpu.memory_space<vmem>>, %arg3: memref<16x128xf32, #tpu.memory_space<vmem>>, %arg4: memref<1x5x8x128xf32, #tpu.memory_space<vmem>>) attributes {dimension_semantics = [#tpu.dimension_semantics<parallel>, #tpu.dimension_semantics<arbitrary>], iteration_bounds = array<i64: 1, 1>, scalar_prefetch = 0 : i64, scratch_operands = 0 : i64, tpu.core_type = #tpu.core_type<tc>, window_params = [{transform_indices = @transform_0, window_bounds = array<i64: 16, 128>}, {transform_indices = @transform_1, window_bounds = array<i64: 16, 128>}, {transform_indices = @transform_2, window_bounds = array<i64: 1, 5, 8, 128>}]} {
    %c0_i32 = arith.constant 0 : i32
    %0 = arith.cmpi eq, %arg1, %c0_i32 : i32
    %1 = arith.extui %0 : i1 to i32
    %c0_i32_0 = arith.constant 0 : i32
    %2 = arith.cmpi ne, %1, %c0_i32_0 : i32
    scf.if %2 {
      %cst_51 = arith.constant 0.000000e+00 : f32
      %66 = vector.broadcast %cst_51 : f32 to vector<1x5x8x128xf32>
      %c0_52 = arith.constant 0 : index
      %c0_53 = arith.constant 0 : index
      %c0_54 = arith.constant 0 : index
      %c0_55 = arith.constant 0 : index
      %67 = vector.load %arg4[%c0_52, %c0_53, %c0_54, %c0_55] : memref<1x5x8x128xf32, #tpu.memory_space<vmem>>, vector<1x5x8x128xf32>
      tpu.vector_store %arg4[%c0_52, %c0_53, %c0_54, %c0_55], %66 {strides = array<i32>} : memref<1x5x8x128xf32, #tpu.memory_space<vmem>>, vector<1x5x8x128xf32>,
    } else {
    }
    %c1_i32 = arith.constant 1 : i32
    %3 = arith.muli %arg0, %c1_i32 : i32
    %4 = arith.addi %3, %arg1 : i32
    %c16_i32 = arith.constant 16 : i32
    %5 = arith.muli %4, %c16_i32 : i32
    %c16_i32_1 = arith.constant 16 : i32
    %6 = arith.subi %c16_i32_1, %5 : i32
    %c0_i32_2 = arith.constant 0 : i32
    %c16_i32_3 = arith.constant 16 : i32
    %7 = arith.maxsi %c0_i32_2, %6 : i32
    %8 = arith.minsi %c16_i32_3, %7 : i32
    %9 = tpu.iota {dimensions = array<i32: 0>} : vector<16x128xi32>
    %cst = arith.constant 0.000000e+00 : f32
    %10 = vector.broadcast %cst : f32 to vector<8x128xf32>
    %c0 = arith.constant 0 : index
    %c0_4 = arith.constant 0 : index
    %11 = vector.load %arg2[%c0, %c0_4] : memref<16x128xf32, #tpu.memory_space<vmem>>, vector<16x128xf32>
    %c0_5 = arith.constant 0 : index
    %c0_6 = arith.constant 0 : index
    %12 = vector.load %arg3[%c0_5, %c0_6] : memref<16x128xf32, #tpu.memory_space<vmem>>, vector<16x128xf32>
    %c0_i32_7 = arith.constant 0 : i32
    %13 = vector.broadcast %c0_i32_7 : i32 to vector<16x128xi32>
    %14 = arith.addi %13, %9 : vector<16x128xi32>
    %15 = vector.broadcast %8 : i32 to vector<16x128xi32>
    %16 = arith.cmpi slt, %14, %15 : vector<16x128xi32>
    %cst_8 = arith.constant 0.000000e+00 : f32
    %17 = vector.broadcast %cst_8 : f32 to vector<16x128xf32>
    %18 = arith.select %16, %11, %17 : vector<16x128xi1>, vector<16x128xf32>
    %cst_9 = arith.constant 0.000000e+00 : f32
    %19 = vector.broadcast %cst_9 : f32 to vector<16x128xf32>
    %20 = arith.select %16, %12, %19 : vector<16x128xi1>, vector<16x128xf32>
    %21 = vector.shape_cast %18 : vector<16x128xf32> to vector<2x8x128xf32>
    %22 = vector.shape_cast %20 : vector<16x128xf32> to vector<2x8x128xf32>
    %cst_10 = arith.constant dense<0.000000e+00> : vector<8x128xf32>
    %23 = vector.multi_reduction <add>, %21, %cst_10 [0] : vector<2x8x128xf32> to vector<8x128xf32>
    %24 = arith.addf %10, %23 : vector<8x128xf32>
    %cst_11 = arith.constant dense<0.000000e+00> : vector<8x128xf32>
    %25 = vector.multi_reduction <add>, %22, %cst_11 [0] : vector<2x8x128xf32> to vector<8x128xf32>
    %26 = arith.addf %10, %25 : vector<8x128xf32>
    %27 = arith.mulf %21, %21 : vector<2x8x128xf32>
    %cst_12 = arith.constant dense<0.000000e+00> : vector<8x128xf32>
    %28 = vector.multi_reduction <add>, %27, %cst_12 [0] : vector<2x8x128xf32> to vector<8x128xf32>
    %29 = arith.addf %10, %28 : vector<8x128xf32>
    %30 = arith.mulf %22, %22 : vector<2x8x128xf32>
    %cst_13 = arith.constant dense<0.000000e+00> : vector<8x128xf32>
    %31 = vector.multi_reduction <add>, %30, %cst_13 [0] : vector<2x8x128xf32> to vector<8x128xf32>
    %32 = arith.addf %10, %31 : vector<8x128xf32>
    %33 = arith.mulf %21, %22 : vector<2x8x128xf32>
    %cst_14 = arith.constant dense<0.000000e+00> : vector<8x128xf32>
    %34 = vector.multi_reduction <add>, %33, %cst_14 [0] : vector<2x8x128xf32> to vector<8x128xf32>
    %35 = arith.addf %10, %34 : vector<8x128xf32>
    %c0_15 = arith.constant 0 : index
    %c0_16 = arith.constant 0 : index
    %c0_17 = arith.constant 0 : index
    %c0_18 = arith.constant 0 : index
    %36 = vector.load %arg4[%c0_15, %c0_16, %c0_17, %c0_18] : memref<1x5x8x128xf32, #tpu.memory_space<vmem>>, vector<1x1x8x128xf32>
    %37 = vector.shape_cast %36 : vector<1x1x8x128xf32> to vector<8x128xf32>
    %38 = arith.addf %37, %24 : vector<8x128xf32>
    %c0_19 = arith.constant 0 : index
    %c0_20 = arith.constant 0 : index
    %c0_21 = arith.constant 0 : index
    %c0_22 = arith.constant 0 : index
    %39 = vector.load %arg4[%c0_19, %c0_20, %c0_21, %c0_22] : memref<1x5x8x128xf32, #tpu.memory_space<vmem>>, vector<1x1x8x128xf32>
    %40 = vector.shape_cast %39 : vector<1x1x8x128xf32> to vector<8x128xf32>
    %41 = vector.shape_cast %38 : vector<8x128xf32> to vector<1x1x8x128xf32>
    tpu.vector_store %arg4[%c0_19, %c0_20, %c0_21, %c0_22], %41 {strides = array<i32>} : memref<1x5x8x128xf32, #tpu.memory_space<vmem>>, vector<1x1x8x128xf32>,
    %c0_23 = arith.constant 0 : index
    %c1 = arith.constant 1 : index
    %c0_24 = arith.constant 0 : index
    %c0_25 = arith.constant 0 : index
    %42 = vector.load %arg4[%c0_23, %c1, %c0_24, %c0_25] : memref<1x5x8x128xf32, #tpu.memory_space<vmem>>, vector<1x1x8x128xf32>
    %43 = vector.shape_cast %42 : vector<1x1x8x128xf32> to vector<8x128xf32>
    %44 = arith.addf %43, %26 : vector<8x128xf32>
    %c0_26 = arith.constant 0 : index
    %c1_27 = arith.constant 1 : index
    %c0_28 = arith.constant 0 : index
    %c0_29 = arith.constant 0 : index
    %45 = vector.load %arg4[%c0_26, %c1_27, %c0_28, %c0_29] : memref<1x5x8x128xf32, #tpu.memory_space<vmem>>, vector<1x1x8x128xf32>
    %46 = vector.shape_cast %45 : vector<1x1x8x128xf32> to vector<8x128xf32>
    %47 = vector.shape_cast %44 : vector<8x128xf32> to vector<1x1x8x128xf32>
    tpu.vector_store %arg4[%c0_26, %c1_27, %c0_28, %c0_29], %47 {strides = array<i32>} : memref<1x5x8x128xf32, #tpu.memory_space<vmem>>, vector<1x1x8x128xf32>,
    %c0_30 = arith.constant 0 : index
    %c2 = arith.constant 2 : index
    %c0_31 = arith.constant 0 : index
    %c0_32 = arith.constant 0 : index
    %48 = vector.load %arg4[%c0_30, %c2, %c0_31, %c0_32] : memref<1x5x8x128xf32, #tpu.memory_space<vmem>>, vector<1x1x8x128xf32>
    %49 = vector.shape_cast %48 : vector<1x1x8x128xf32> to vector<8x128xf32>
    %50 = arith.addf %49, %29 : vector<8x128xf32>
    %c0_33 = arith.constant 0 : index
    %c2_34 = arith.constant 2 : index
    %c0_35 = arith.constant 0 : index
    %c0_36 = arith.constant 0 : index
    %51 = vector.load %arg4[%c0_33, %c2_34, %c0_35, %c0_36] : memref<1x5x8x128xf32, #tpu.memory_space<vmem>>, vector<1x1x8x128xf32>
    %52 = vector.shape_cast %51 : vector<1x1x8x128xf32> to vector<8x128xf32>
    %53 = vector.shape_cast %50 : vector<8x128xf32> to vector<1x1x8x128xf32>
    tpu.vector_store %arg4[%c0_33, %c2_34, %c0_35, %c0_36], %53 {strides = array<i32>} : memref<1x5x8x128xf32, #tpu.memory_space<vmem>>, vector<1x1x8x128xf32>,
    %c0_37 = arith.constant 0 : index
    %c3 = arith.constant 3 : index
    %c0_38 = arith.constant 0 : index
    %c0_39 = arith.constant 0 : index
    %54 = vector.load %arg4[%c0_37, %c3, %c0_38, %c0_39] : memref<1x5x8x128xf32, #tpu.memory_space<vmem>>, vector<1x1x8x128xf32>
    %55 = vector.shape_cast %54 : vector<1x1x8x128xf32> to vector<8x128xf32>
    %56 = arith.addf %55, %32 : vector<8x128xf32>
    %c0_40 = arith.constant 0 : index
    %c3_41 = arith.constant 3 : index
    %c0_42 = arith.constant 0 : index
    %c0_43 = arith.constant 0 : index
    %57 = vector.load %arg4[%c0_40, %c3_41, %c0_42, %c0_43] : memref<1x5x8x128xf32, #tpu.memory_space<vmem>>, vector<1x1x8x128xf32>
    %58 = vector.shape_cast %57 : vector<1x1x8x128xf32> to vector<8x128xf32>
    %59 = vector.shape_cast %56 : vector<8x128xf32> to vector<1x1x8x128xf32>
    tpu.vector_store %arg4[%c0_40, %c3_41, %c0_42, %c0_43], %59 {strides = array<i32>} : memref<1x5x8x128xf32, #tpu.memory_space<vmem>>, vector<1x1x8x128xf32>,
    %c0_44 = arith.constant 0 : index
    %c4 = arith.constant 4 : index
    %c0_45 = arith.constant 0 : index
    %c0_46 = arith.constant 0 : index
    %60 = vector.load %arg4[%c0_44, %c4, %c0_45, %c0_46] : memref<1x5x8x128xf32, #tpu.memory_space<vmem>>, vector<1x1x8x128xf32>
    %61 = vector.shape_cast %60 : vector<1x1x8x128xf32> to vector<8x128xf32>
    %62 = arith.addf %61, %35 : vector<8x128xf32>
    %c0_47 = arith.constant 0 : index
    %c4_48 = arith.constant 4 : index
    %c0_49 = arith.constant 0 : index
    %c0_50 = arith.constant 0 : index
    %63 = vector.load %arg4[%c0_47, %c4_48, %c0_49, %c0_50] : memref<1x5x8x128xf32, #tpu.memory_space<vmem>>, vector<1x1x8x128xf32>
    %64 = vector.shape_cast %63 : vector<1x1x8x128xf32> to vector<8x128xf32>
    %65 = vector.shape_cast %62 : vector<8x128xf32> to vector<1x1x8x128xf32>
    tpu.vector_store %arg4[%c0_47, %c4_48, %c0_49, %c0_50], %65 {strides = array<i32>} : memref<1x5x8x128xf32, #tpu.memory_space<vmem>>, vector<1x1x8x128xf32>,
    return
  }
  func.func @transform_0(%arg0: i32, %arg1: i32) -> (i32, i32) {
    %c1_i32 = arith.constant 1 : i32
    %0 = arith.muli %arg0, %c1_i32 : i32
    %1 = arith.addi %0, %arg1 : i32
    %c0_i32 = arith.constant 0 : i32
    %2 = arith.minsi %1, %c0_i32 : i32
    %c0_i32_0 = arith.constant 0 : i32
    %c0_i32_1 = arith.constant 0 : i32
    return %2, %c0_i32_0 : i32, i32
  }
  func.func @transform_1(%arg0: i32, %arg1: i32) -> (i32, i32) {
    %c1_i32 = arith.constant 1 : i32
    %0 = arith.muli %arg0, %c1_i32 : i32
    %1 = arith.addi %0, %arg1 : i32
    %c0_i32 = arith.constant 0 : i32
    %2 = arith.minsi %1, %c0_i32 : i32
    %c0_i32_0 = arith.constant 0 : i32
    %c0_i32_1 = arith.constant 0 : i32
    return %2, %c0_i32_0 : i32, i32
  }
  func.func @transform_2(%arg0: i32, %arg1: i32) -> (i32, i32, i32, i32) {
    %c0_i32 = arith.constant 0 : i32
    %c0_i32_0 = arith.constant 0 : i32
    %c0_i32_1 = arith.constant 0 : i32
    %c0_i32_2 = arith.constant 0 : i32
    return %arg0, %c0_i32, %c0_i32_0, %c0_i32_1 : i32, i32, i32, i32
  }
}

</mosaic_0001>

<llo_original>
// kernel: tpu_custom_call.1
$region0: #{tpu_custom_call.1}
  #allocation0 [shape = 'u32[]', space=smem, size = 0x4, offset = 0x4, fixed_abs, tag = 'smem constant byte address 0x4 - core index']
  #allocation1 [shape = 'u32[144,128]{1,0:T(1,128)}', space=vmem, size = 0x12000, scoped, tag = 'internal scratch']
  %s0 = inlined_call_operand.hbm [shape: f32[16,128], index: 0, kind: input, shape index: {}]
  %s1 = inlined_call_operand.hbm [shape: f32[16,128], index: 1, kind: input, shape index: {}]
  %s2 = inlined_call_operand.hbm [shape: f32[1,5,8,128], index: 2, kind: output, shape index: {}]
  %s3 = sld [smem:[#allocation0]]
  $region30: #{tpu_custom_call.1} parent=0
    _
  %s5 = ssub.s32 1, %s3
  %s6 = scalar_select 0, %s5, %s3
  $region1: #{tpu_custom_call.1} parent=0
    #allocation2 [shape = 'u8[8192]{0}', space=vmem, size = 0x2000, scoped, tag = 'input window, operand 0, single buffered']
    #allocation3 [shape = 's32[1]{0}', space=sflag, size = 0x4, scoped, tag = 'scoped memory for tpu_custom_call.1']
    #allocation4 [shape = 's32[1]{0}', space=sflag, size = 0x4, scoped, tag = 'scoped memory for tpu_custom_call.1']
    #allocation5 [shape = 'u8[8192]{0}', space=vmem, size = 0x2000, scoped, tag = 'input window, operand 1, single buffered']
    #allocation6 [shape = 's32[1]{0}', space=sflag, size = 0x4, scoped, tag = 'scoped memory for tpu_custom_call.1']
    #allocation7 [shape = 'u8[20480]{0}', space=vmem, size = 0x5000, scoped, tag = 'output window, operand 0, single buffered']
    %7 = vsyncpa [#allocation3], 0
    %8 = vsyncpa [#allocation6], 0
    %9 = vsyncpa [#allocation4], 0
    // Predicated region
    $region2: #{tpu_custom_call.1} parent=1 // pred_check
      _
    $region3: #{tpu_custom_call.1} parent=1 // pred_check_branch
      %11 = sbr.rel (0) target = $region5
    $region4: #{tpu_custom_call.1} parent=1 // pred_region
      %s12 = sadd.s32 0, 0
      %p13 = scmp.lt.s32.totalorder %s12, 0
      %s14 = scalar_select %p13, %s12, 0
      %s15 = smul.u32 2, %s14
      %s17 = ssub.s32 256, 256
      %18 = vsyncadd [#allocation3], %s17
      %s19 = smul.addr %s15, 128
      %s20 = scalar_lea.hbm %s0, %s19
      %s21 = sshll.u32 [#allocation2], 4
      %s22 = int_to_ptr.vmem [resolvable:$true] %s21
      %27 = dma.hbm_to_vmem [thread:$0]  %s20, 256, %s22, [#allocation3], 128, 128, 8
    $region5: #{tpu_custom_call.1} parent=1 // pred_fallthru
      _
    // Predicated region
    $region6: #{tpu_custom_call.1} parent=1 // pred_check
      _
    $region7: #{tpu_custom_call.1} parent=1 // pred_check_branch
      %29 = sbr.rel (0) target = $region9
    $region8: #{tpu_custom_call.1} parent=1 // pred_region
      %s30 = sadd.s32 0, 0
      %p31 = scmp.lt.s32.totalorder %s30, 0
      %s32 = scalar_select %p31, %s30, 0
      %s33 = smul.u32 2, %s32
      %s35 = ssub.s32 256, 256
      %36 = vsyncadd [#allocation6], %s35
      %s37 = smul.addr %s33, 128
      %s38 = scalar_lea.hbm %s1, %s37
      %s39 = sshll.u32 [#allocation5], 4
      %s40 = int_to_ptr.vmem [resolvable:$true] %s39
      %45 = dma.hbm_to_vmem [thread:$0]  %s38, 256, %s40, [#allocation6], 128, 128, 8
    $region9: #{tpu_custom_call.1} parent=1 // pred_fallthru
      _
    // Predicated region
    $region10: #{tpu_custom_call.1} parent=1 // pred_check
      _
    $region11: #{tpu_custom_call.1} parent=1 // pred_check_branch
      %47 = sbr.rel (0) target = $region13
    $region12: #{tpu_custom_call.1} parent=1 // pred_region
      %48 = dma.done [#allocation3], 256
    $region13: #{tpu_custom_call.1} parent=1 // pred_fallthru
      _
    // Predicated region
    $region14: #{tpu_custom_call.1} parent=1 // pred_check
      _
    $region15: #{tpu_custom_call.1} parent=1 // pred_check_branch
      %50 = sbr.rel (0) target = $region17
    $region16: #{tpu_custom_call.1} parent=1 // pred_region
      %51 = dma.done [#allocation6], 256
    $region17: #{tpu_custom_call.1} parent=1 // pred_fallthru
      _
    %s52 = sadd.s32 0, 0
    %p53 = scmp.lt.s32.totalorder %s52, 0
    %s54 = scalar_select %p53, %s52, 0
    %s55 = smul.u32 2, %s54
    %s56 = sadd.s32 0, 0
    %p57 = scmp.lt.s32.totalorder %s56, 0
    %s58 = scalar_select %p57, %s56, 0
    %s59 = smul.u32 2, %s58
    %p60 = scmp.eq.s32.totalorder 0, 0
    // Predicated region
    $region18: #{tpu_custom_call.1} parent=1 // pred_check
      %p61 = pneg %p60
    $region19: #{tpu_custom_call.1} parent=1 // pred_check_branch
      %63 = sbr.rel (%p61) target = $region21
    $region20: #{tpu_custom_call.1} parent=1 // pred_region
      %64 = vst [vmem:[#allocation7] sm:$0xff] 0.0
      %65 = vst [vmem:[#allocation7 + $0x8] sm:$0xff] 0.0
      %66 = vst [vmem:[#allocation7 + $0x10] sm:$0xff] 0.0
      %67 = vst [vmem:[#allocation7 + $0x18] sm:$0xff] 0.0
      %68 = vst [vmem:[#allocation7 + $0x20] sm:$0xff] 0.0
    $region21: #{tpu_custom_call.1} parent=1 // pred_fallthru
      _
    %s69 = sadd.s32 0, 0
    %s70 = smul.u32 %s69, 16
    %s71 = ssub.s32 16, %s70
    %p72 = scmp.gt.s32.totalorder %s71, 0
    %s73 = scalar_select %p72, %s71, 0
    %p74 = scmp.lt.s32.totalorder %s73, 16
    %s75 = scalar_select %p74, %s73, 16
    %v76 = vlaneseq
    %v77 = vshrl.u32 %v76, 7
    %v78 = vadd.s32 %v77, 8
    %v79 = vld [vmem:[#allocation2] sm:$0xff]
    %v80 = vld [vmem:[#allocation2 + $0x8] sm:$0xff]
    %v81 = vld [vmem:[#allocation5] sm:$0xff]
    %v82 = vld [vmem:[#allocation5 + $0x8] sm:$0xff]
    %v83 = vstv %s75
    %vm84 = vcmp.lt.s32.totalorder %v77, %v83
    %vm85 = vcmp.lt.s32.totalorder %v78, %v83
    %v86 = vsel %vm84, %v79, 0.0
    %v87 = vsel %vm85, %v80, 0.0
    %v88 = vsel %vm84, %v81, 0.0
    %v89 = vsel %vm85, %v82, 0.0
    %v90 = vadd.f32 %v86, %v87
    %v91 = vadd.f32 %v90, 0.0
    %v92 = vadd.f32 %v88, %v89
    %v93 = vadd.f32 %v92, 0.0
    %v94 = vmul.f32 %v86, %v86
    %v95 = vmul.f32 %v87, %v87
    %v96 = vadd.f32 %v94, %v95
    %v97 = vadd.f32 %v96, 0.0
    %v98 = vmul.f32 %v88, %v88
    %v99 = vmul.f32 %v89, %v89
    %v100 = vadd.f32 %v98, %v99
    %v101 = vadd.f32 %v100, 0.0
    %v102 = vmul.f32 %v86, %v88
    %v103 = vmul.f32 %v87, %v89
    %v104 = vadd.f32 %v102, %v103
    %v105 = vadd.f32 %v104, 0.0
    %v106 = vld [vmem:[#allocation7] sm:$0xff]
    %v107 = vadd.f32 %v106, %v91
    %108 = vst [vmem:[#allocation7] sm:$0xff] %v107
    %s109 = scalar_lea.vmem [#allocation7], 8
    %v110 = vld [vmem:[%s109] sm:$0xff]
    %v111 = vadd.f32 %v110, %v93
    %112 = vst [vmem:[%s109] sm:$0xff] %v111
    %s113 = scalar_lea.vmem [#allocation7], 16
    %v114 = vld [vmem:[%s113] sm:$0xff]
    %v115 = vadd.f32 %v114, %v97
    %116 = vst [vmem:[%s113] sm:$0xff] %v115
    %s117 = scalar_lea.vmem [#allocation7], 24
    %v118 = vld [vmem:[%s117] sm:$0xff]
    %v119 = vadd.f32 %v118, %v101
    %120 = vst [vmem:[%s117] sm:$0xff] %v119
    %s121 = scalar_lea.vmem [#allocation7], 32
    %v122 = vld [vmem:[%s121] sm:$0xff]
    %v123 = vadd.f32 %v122, %v105
    %124 = vst [vmem:[%s121] sm:$0xff] %v123
    // Predicated region
    $region22: #{tpu_custom_call.1} parent=1 // pred_check
      _
    $region23: #{tpu_custom_call.1} parent=1 // pred_check_branch
      %126 = sbr.rel (0) target = $region25
    $region24: #{tpu_custom_call.1} parent=1 // pred_region
      %s128 = ssub.s32 640, 640
      %129 = vsyncadd [#allocation4], %s128
      %s130 = sshll.u32 [#allocation7], 4
      %s131 = int_to_ptr.vmem [resolvable:$true] %s130
      %136 = dma.vmem_to_hbm [thread:$0]  %s131, 640, %s2, [#allocation4], 128, 128, 8
    $region25: #{tpu_custom_call.1} parent=1 // pred_fallthru
      _
    // Predicated region
    $region26: #{tpu_custom_call.1} parent=1 // pred_check
      _
    $region27: #{tpu_custom_call.1} parent=1 // pred_check_branch
      %138 = sbr.rel (0) target = $region29
    $region28: #{tpu_custom_call.1} parent=1 // pred_region
      %139 = dma.done [#allocation4], 640
    $region29: #{tpu_custom_call.1} parent=1 // pred_fallthru
      _
    %140 = vsyncpa [#allocation3], 1
    %141 = vsyncpa [#allocation6], 1
    %142 = vsyncpa [#allocation4], 1

</llo_original>
